<compile_context>
chip_gen: v5e
topology: v5e:2x2
jax: 0.10.0
libtpu: 0.0.40
codegen_flags: <defaults>
</compile_context>

<pallas_src>
import functools

import jax
import jax.numpy as jnp
from jax import lax
from jax.experimental import pallas as pl
from jax.experimental.pallas import tpu as pltpu


# ------------------------------ shared helpers ------------------------------ #

def _rms_norm(x, w, eps=1e-7):
    # x: [S, C] float32, w: [1, C] float32
    var = jnp.mean(x * x, axis=-1, keepdims=True)
    return (x * lax.rsqrt(var + eps)) * w


# ------------------------- kernel 1: KV projection -------------------------- #
# Computes, once per sequence element (grid = (B, seq-tiles)):
#   K[b, h, s, :] = [ k_nope_h(s) | k_emb(s) ]   (bf16, head-major)
#   V[b, h, s, :] =   v_h(s)                      (bf16, head-major)

def mla_kv_kernel(x_ref, cos_ref, sin_ref, wkvd_ref, kvnw_ref, wkvup_ref,
                  k_out_ref, v_out_ref, *, head_num, dph, d_rope, dc_kv, dc_v):
    bf16 = jnp.bfloat16
    H = head_num

    x = x_ref[0]                                                   # [ts, d] bf16
    kvd = jnp.dot(x, wkvd_ref[...], preferred_element_type=jnp.float32)
    ckv = _rms_norm(kvd[:, :dc_kv], kvnw_ref[...]).astype(bf16)    # [ts, dc_kv]
    k_rope = kvd[:, dc_kv:dc_kv + d_rope]                          # de-interleave folded in W
    k_rot = kvd[:, dc_kv + d_rope:]                                # rotate_half folded in W
    k_emb = (k_rope * cos_ref[0] + k_rot * sin_ref[0]).astype(bf16)  # [ts, d_rope]

    kv_all = jnp.dot(ckv, wkvup_ref[...], preferred_element_type=jnp.float32)
    k_nope = kv_all[:, :H * dph].astype(bf16)                      # [ts, H*dph]
    v_all = kv_all[:, H * dph:].astype(bf16)                       # [ts, H*dc_v]

    # one-time head-major re-layout (amortized over all query tiles)
    for h in range(H):
        k_out_ref[0, h, :, :dph] = k_nope[:, h * dph:(h + 1) * dph]
        k_out_ref[0, h, :, dph:] = k_emb
        v_out_ref[0, h] = v_all[:, h * dc_v:(h + 1) * dc_v]


# -------------------- kernel 2: flash-style MLA attention ------------------- #
# grid = (B, q-tiles, kv-chunks); kv axis is the "arbitrary" reduction axis.

def mla_attn_kernel(xq_ref, cos_ref, sin_ref, k_ref, v_ref,
                    wqd_ref, qdnw_ref, wqup_ref, wout_ref,
                    o_ref,
                    q_scr, m_scr, l_scr, acc_scr, heads_scr,
                    *, head_num, dph, d_rope, dc_v):
    # TODO(synk): attn_mask / dropout (use_dropout=True) paths not implemented;
    # this matches the forward with mask=None and dropout_p=0.0.
    bf16 = jnp.bfloat16
    H = head_num
    nope_w = H * dph
    rope_w = H * d_rope
    kv_i = pl.program_id(2)

    # ---- once per (batch, q-tile): Q projection + RoPE, staged head-major ----
    @pl.when(kv_i == 0)
    def _():
        xq = xq_ref[0]                                             # [tq, d] bf16
        qc = jnp.dot(xq, wqd_ref[...], preferred_element_type=jnp.float32)
        qc = _rms_norm(qc, qdnw_ref[...]).astype(bf16)
        # attn_scale is folded into wq_up in the wrapper
        q_all = jnp.dot(qc, wqup_ref[...], preferred_element_type=jnp.float32)
        q_nope = q_all[:, :nope_w]                                 # [tq, H*dph]
        q_rope = q_all[:, nope_w:nope_w + rope_w]                  # [tq, H*d_rope]
        q_rot = q_all[:, nope_w + rope_w:]                         # rotate_half folded in W
        cos = jnp.concatenate([cos_ref[0]] * H, axis=-1)           # [tq, H*d_rope]
        sin = jnp.concatenate([sin_ref[0]] * H, axis=-1)
        q_emb = q_rope * cos + q_rot * sin
        for h in range(H):                                         # once per q tile
            q_scr[h, :, :dph] = q_nope[:, h * dph:(h + 1) * dph].astype(bf16)
            q_scr[h, :, dph:] = q_emb[:, h * d_rope:(h + 1) * d_rope].astype(bf16)
        m_scr[...] = jnp.full_like(m_scr, -jnp.inf)
        l_scr[...] = jnp.zeros_like(l_scr)
        acc_scr[...] = jnp.zeros_like(acc_scr)

    # ---- per KV chunk: online softmax, head-by-head (bounded live set) ----
    def head_step(h, carry):
        qh = q_scr[h]                                              # [tq, dph+d_rope] bf16
        kh = k_ref[0, h]                                           # [tkv, dph+d_rope] bf16
        vh = v_ref[0, h]                                           # [tkv, dc_v] bf16
        s = lax.dot_general(qh, kh, (((1,), (1,)), ((), ())),
                            preferred_element_type=jnp.float32)    # [tq, tkv]
        m_prev = m_scr[h]                                          # [tq, 1]
        m_new = jnp.maximum(m_prev, jnp.max(s, axis=-1, keepdims=True))
        alpha = jnp.exp(m_prev - m_new)
        p = jnp.exp(s - m_new)
        l_scr[h] = alpha * l_scr[h] + jnp.sum(p, axis=-1, keepdims=True)
        acc_scr[h] = alpha * acc_scr[h] + jnp.dot(
            p.astype(bf16), vh, preferred_element_type=jnp.float32)
        m_scr[h] = m_new
        return carry

    lax.fori_loop(0, H, head_step, 0, unroll=True)

    # ---- once per (batch, q-tile): normalize, combine heads, out-projection ----
    @pl.when(kv_i == pl.num_programs(2) - 1)
    def _():
        for h in range(H):
            inv_l = pl.reciprocal(l_scr[h], approx=True)           # [tq, 1]
            heads_scr[:, h * dc_v:(h + 1) * dc_v] = (acc_scr[h] * inv_l).astype(bf16)
        out = jnp.dot(heads_scr[...], wout_ref[...],
                      preferred_element_type=jnp.float32)          # [tq, d] lane-dense
        o_ref[0] = out.astype(o_ref.dtype)


# ---------------------------------- wrapper --------------------------------- #

def vit_mla_forward(x, pos_ids, params, *, d, d_pre_head, head_num,
                    q_tile=256, kv_tile=512, kv_proj_tile=256):
    B, S, _ = x.shape
    H = head_num
    dph = d_pre_head
    d_rope = dph // 2
    dc_v = dph
    dc_kv = dph // 8
    dc_q = d // 4
    qhd = dph + d_rope
    meg_d = dph + dc_v
    d_k = dph + d_rope
    attn_scale = float(qhd) ** (-0.5)
    half = d_rope // 2
    bf16 = jnp.bfloat16
    f32 = jnp.float32

    # ---- tiling ----
    tq = S if S <= q_tile else q_tile
    # v7x: keep at least 2 parallel grid points so both TensorCores get work
    if B * (S // tq) < 2 and tq >= 16 and tq % 2 == 0 and S % (tq // 2) == 0:
        tq //= 2
    assert S % tq == 0, "seq_len must be divisible by the query tile"
    n_qt = S // tq
    tkv = S if S <= kv_tile else kv_tile
    assert S % tkv == 0, "seq_len must be divisible by the kv chunk"
    n_kv = S // tkv
    ts = S if S <= kv_proj_tile else kv_proj_tile
    assert S % ts == 0, "seq_len must be divisible by the kv-projection tile"
    n_st = S // ts

    # ---- per-generation VMEM budget (v5e/v6e: 128 MiB, v7x: 64 MiB) ----
    try:
        vmem_cap = int(pltpu.get_tpu_info().vmem_capacity_bytes)
    except Exception:
        vmem_cap = 64 * 1024 * 1024
    vmem_limit = min((vmem_cap * 3) // 4, 100 * 1024 * 1024)

    # ---- RoPE cos/sin at pos_ids (== cos_cached[pos_ids]); shared by Q and K ----
    inv_freq = 1.0 / (10000.0 ** (jnp.arange(0, d_rope, 2, dtype=f32) / d_rope))
    freqs = pos_ids.astype(f32)[..., None] * inv_freq[None, None, :]
    emb = jnp.concatenate([freqs, freqs], axis=-1)                  # [B, S, d_rope]
    cos = jnp.cos(emb)
    sin = jnp.sin(emb)

    # de-interleave permutation implemented by RoPE_reshape: [x0,x2,...,x1,x3,...]
    perm = jnp.concatenate([jnp.arange(0, d_rope, 2), jnp.arange(1, d_rope, 2)])

    def fold_rot(w):
        # columns such that  x @ fold_rot(W) == rotate_half(x @ W)
        return jnp.concatenate([-w[..., half:], w[..., :half]], axis=-1)

    # ---- Q weights (torch Linear is [out, in]; kernels want [in, out]) ----
    wqd = params["q_down"].T.astype(bf16)                           # [d, dc_q]
    qdnw = params["q_down_norm_w"].reshape(1, dc_q).astype(f32)
    wqu = params["q_up"].T.reshape(dc_q, H, qhd)                    # [dc_q, H, qhd]
    wqun = wqu[:, :, :dph].reshape(dc_q, H * dph)
    wqur = wqu[:, :, dph:][:, :, perm]                              # [dc_q, H, d_rope]
    # attn_scale folded into all q_up columns (nope, rope, rot)
    wq_up = (attn_scale * jnp.concatenate(
        [wqun, wqur.reshape(dc_q, H * d_rope),
         fold_rot(wqur).reshape(dc_q, H * d_rope)], axis=-1)).astype(bf16)

    # ---- KV weights ----
    wkvd = params["kv_down"].T                                      # [d, dc_kv + d_rope]
    wkvd_c = wkvd[:, :dc_kv]
    wkvd_r = wkvd[:, dc_kv:][:, perm]
    wkvd_all = jnp.concatenate([wkvd_c, wkvd_r, fold_rot(wkvd_r)],
                               axis=-1).astype(bf16)                # [d, dc_kv + 2*d_rope]
    kvnw = params["kv_norm_w"].reshape(1, dc_kv).astype(f32)
    wkvu = params["kv_up"].T.reshape(dc_kv, H, meg_d)
    wkv_up = jnp.concatenate([wkvu[:, :, :dph].reshape(dc_kv, H * dph),
                              wkvu[:, :, dph:].reshape(dc_kv, H * dc_v)],
                             axis=-1).astype(bf16)                  # [dc_kv, H*(dph+dc_v)]
    wout = params["out_proj"].T.astype(bf16)                        # [H*dc_v, d]

    x_bf = x.astype(bf16)

    def const_spec(shape):
        # whole-array operand with a constant block index -> single-buffer it
        ndim = len(shape)
        imap = lambda *g: (0,) * ndim
        try:
            return pl.BlockSpec(shape, imap, pipeline_mode=pl.Buffered(1))
        except Exception:
            return pl.BlockSpec(shape, imap)

    # ---------------- pass 1: KV projection to head-major bf16 ---------------- #
    kv_kernel = functools.partial(mla_kv_kernel, head_num=H, dph=dph,
                                  d_rope=d_rope, dc_kv=dc_kv, dc_v=dc_v)
    k_hm, v_hm = pl.pallas_call(
        kv_kernel,
        out_shape=(jax.ShapeDtypeStruct((B, H, S, d_k), bf16),
                   jax.ShapeDtypeStruct((B, H, S, dc_v), bf16)),
        grid=(B, n_st),
        in_specs=[pl.BlockSpec((1, ts, d), lambda b, s: (b, s, 0)),
                  pl.BlockSpec((1, ts, d_rope), lambda b, s: (b, s, 0)),
                  pl.BlockSpec((1, ts, d_rope), lambda b, s: (b, s, 0)),
                  const_spec(wkvd_all.shape),
                  const_spec(kvnw.shape),
                  const_spec(wkv_up.shape)],
        out_specs=(pl.BlockSpec((1, H, ts, d_k), lambda b, s: (b, 0, s, 0)),
                   pl.BlockSpec((1, H, ts, dc_v), lambda b, s: (b, 0, s, 0))),
        compiler_params=pltpu.CompilerParams(
            dimension_semantics=("parallel", "parallel"),
            vmem_limit_bytes=vmem_limit),
    )(x_bf, cos, sin, wkvd_all, kvnw, wkv_up)

    # ---------------- pass 2: flash-style attention + out-projection ---------- #
    attn_kernel = functools.partial(mla_attn_kernel, head_num=H, dph=dph,
                                    d_rope=d_rope, dc_v=dc_v)
    return pl.pallas_call(
        attn_kernel,
        out_shape=jax.ShapeDtypeStruct((B, S, d), x.dtype),
        grid=(B, n_qt, n_kv),
        in_specs=[pl.BlockSpec((1, tq, d), lambda b, q, k: (b, q, 0)),
                  pl.BlockSpec((1, tq, d_rope), lambda b, q, k: (b, q, 0)),
                  pl.BlockSpec((1, tq, d_rope), lambda b, q, k: (b, q, 0)),
                  pl.BlockSpec((1, H, tkv, d_k), lambda b, q, k: (b, 0, k, 0)),
                  pl.BlockSpec((1, H, tkv, dc_v), lambda b, q, k: (b, 0, k, 0)),
                  const_spec(wqd.shape),
                  const_spec(qdnw.shape),
                  const_spec(wq_up.shape),
                  const_spec(wout.shape)],
        out_specs=pl.BlockSpec((1, tq, d), lambda b, q, k: (b, q, 0)),
        scratch_shapes=[pltpu.VMEM((H, tq, d_k), bf16),       # staged Q (head-major)
                        pltpu.VMEM((H, tq, 1), f32),          # running max
                        pltpu.VMEM((H, tq, 1), f32),          # running denom
                        pltpu.VMEM((H, tq, dc_v), f32),       # running PV accumulator
                        pltpu.VMEM((tq, H * dc_v), bf16)],    # combined heads
        compiler_params=pltpu.CompilerParams(
            dimension_semantics=("parallel", "parallel", "arbitrary"),
            vmem_limit_bytes=vmem_limit),
    )(x_bf, cos, sin, k_hm, v_hm, wqd, qdnw, wq_up, wout)


# --------------------- pure-JAX reference (torch semantics) ---------------- #

def ref_vit_mla(x, pos_ids, params, *, d, d_pre_head, head_num):
    B, S, _ = x.shape
    d_rope = d_pre_head // 2
    dc_v = d_pre_head
    dc_kv = d_pre_head // 8
    qhd = d_pre_head + d_rope
    meg_d = d_pre_head + dc_v

    def rms(t, w, eps=1e-7):
        var = jnp.mean(t.astype(jnp.float32) ** 2, -1, keepdims=True)
        return w * (t * lax.rsqrt(var + eps))

    q = x @ params["q_down"].T
    q = rms(q, params["q_down_norm_w"])
    q = q @ params["q_up"].T
    q = q.reshape(B, S, head_num, qhd).transpose(0, 2, 1, 3)
    q_nope, q_rope = q[..., :d_pre_head], q[..., d_pre_head:]

    ckv = x @ params["kv_down"].T
    c_kv, k_rope = ckv[..., :dc_kv], ckv[..., dc_kv:]
    kv = rms(c_kv, params["kv_norm_w"]) @ params["kv_up"].T
    kv = kv.reshape(B, S, head_num, meg_d).transpose(0, 2, 1, 3)
    k_nope, value = kv[..., :d_pre_head], kv[..., d_pre_head:]
    k_rope = k_rope.reshape(B, S, 1, d_rope).transpose(0, 2, 1, 3)

    inv_freq = 1.0 / (10000.0 ** (jnp.arange(0, d_rope, 2, dtype=jnp.float32) / d_rope))
    t = jnp.arange(8192, dtype=jnp.float32)
    emb = jnp.concatenate([jnp.outer(t, inv_freq)] * 2, -1)
    cos = jnp.cos(emb)[pos_ids][:, None]      # [B,1,S,d_rope]
    sin = jnp.sin(emb)[pos_ids][:, None]

    def rope_reshape(a):
        b, h, s, dim = a.shape
        return a.reshape(b, h, s, dim // 2, 2).transpose(0, 1, 2, 4, 3).reshape(b, h, s, dim)

    def rotate(a):
        hd = a.shape[-1] // 2
        return jnp.concatenate([-a[..., hd:], a[..., :hd]], -1)

    q_r, k_r = rope_reshape(q_rope), rope_reshape(k_rope)
    q_emb = q_r * cos + rotate(q_r) * sin
    k_emb = k_r * cos + rotate(k_r) * sin

    query = jnp.concatenate([q_nope, q_emb], -1)
    key = jnp.concatenate(
        [k_nope, jnp.broadcast_to(k_emb, (B, head_num, S, d_rope))], -1)

    scale = 1.0 / jnp.sqrt(jnp.float32(qhd))
    scores = jnp.einsum("bhqd,bhkd->bhqk", query, key) * scale
    p = jax.nn.softmax(scores, axis=-1)
    attn = jnp.einsum("bhqk,bhkd->bhqd", p, value)
    attn = attn.transpose(0, 2, 1, 3).reshape(B, S, head_num * dc_v)
    return attn @ params["out_proj"].T


# ---------------------------------- main ----------------------------------- #

if __name__ == "__main__":
    B, S = 2, 8
    d, d_pre_head, head_num = 32, 16, 4
    d_rope = d_pre_head // 2
    dc_v = d_pre_head
    dc_kv = d_pre_head // 8
    dc_q = d // 4
    q_head_dim = d_pre_head + d_rope
    meg_d = d_pre_head + dc_v

    key = jax.random.PRNGKey(0)
    ks = jax.random.split(key, 9)
    params = {
        "q_down":        0.05 * jax.random.normal(ks[0], (dc_q, d), jnp.float32),
        "q_up":          0.05 * jax.random.normal(ks[1], (head_num * q_head_dim, dc_q), jnp.float32),
        "kv_down":       0.05 * jax.random.normal(ks[2], (dc_kv + d_rope, d), jnp.float32),
        "kv_up":         0.05 * jax.random.normal(ks[3], (head_num * meg_d, dc_kv), jnp.float32),
        "out_proj":      0.05 * jax.random.normal(ks[4], (d, head_num * dc_v), jnp.float32),
        "q_down_norm_w": 1.0 + 0.1 * jax.random.normal(ks[5], (dc_q,), jnp.float32),
        "kv_norm_w":     1.0 + 0.1 * jax.random.normal(ks[6], (dc_kv,), jnp.float32),
    }

    x = jax.random.normal(ks[7], (B, S, d), jnp.float32)
    pos_ids = jnp.stack([jnp.arange(S, dtype=jnp.int32),
                         jnp.arange(S, dtype=jnp.int32) + 3])

    out = vit_mla_forward(x, pos_ids, params,
                          d=d, d_pre_head=d_pre_head, head_num=head_num)
    out = jax.block_until_ready(out)

    ref = ref_vit_mla(x, pos_ids, params,
                      d=d, d_pre_head=d_pre_head, head_num=head_num)
    assert out.shape == (B, S, d)
    max_err = float(jnp.max(jnp.abs(out - ref)))
    # kernels run weights/activations in bf16 (f32 accumulation); reference is f32
    if not bool(jnp.allclose(out, ref, atol=2e-3, rtol=3e-2)):
        raise AssertionError(f"Pallas kernel mismatch vs reference, max |err| = {max_err}")
    print("KERNEL_OK")
</pallas_src>

<mosaic_0001>
module attributes {stable_mosaic.version = 11 : i64} {
  func.func @mla_kv_kernel(%arg0: i32, %arg1: i32, %arg2: memref<1x8x32xbf16, #tpu.memory_space<vmem>>, %arg3: memref<1x8x8xf32, #tpu.memory_space<vmem>>, %arg4: memref<1x8x8xf32, #tpu.memory_space<vmem>>, %arg5: memref<32x18xbf16, #tpu.memory_space<vmem>>, %arg6: memref<1x2xf32, #tpu.memory_space<vmem>>, %arg7: memref<2x128xbf16, #tpu.memory_space<vmem>>, %arg8: memref<1x4x8x24xbf16, #tpu.memory_space<vmem>>, %arg9: memref<1x4x8x16xbf16, #tpu.memory_space<vmem>>) attributes {dimension_semantics = [#tpu.dimension_semantics<parallel>, #tpu.dimension_semantics<parallel>], iteration_bounds = array<i64: 2, 1>, scalar_prefetch = 0 : i64, scratch_operands = 0 : i64, tpu.core_type = #tpu.core_type<tc>, window_params = [{transform_indices = @transform_0, window_bounds = array<i64: 1, 8, 32>}, {transform_indices = @transform_1, window_bounds = array<i64: 1, 8, 8>}, {transform_indices = @transform_2, window_bounds = array<i64: 1, 8, 8>}, {pipeline_mode = #tpu.pipeline_mode<synchronous>, transform_indices = @transform_3, window_bounds = array<i64: 32, 18>}, {pipeline_mode = #tpu.pipeline_mode<synchronous>, transform_indices = @transform_4, window_bounds = array<i64: 1, 2>}, {pipeline_mode = #tpu.pipeline_mode<synchronous>, transform_indices = @transform_5, window_bounds = array<i64: 2, 128>}, {transform_indices = @transform_6, window_bounds = array<i64: 1, 4, 8, 24>}, {transform_indices = @transform_7, window_bounds = array<i64: 1, 4, 8, 16>}]} {
    %c0 = arith.constant 0 : index
    %c0_0 = arith.constant 0 : index
    %c0_1 = arith.constant 0 : index
    %0 = vector.load %arg2[%c0, %c0_0, %c0_1] : memref<1x8x32xbf16, #tpu.memory_space<vmem>>, vector<1x8x32xbf16>
    %1 = vector.shape_cast %0 : vector<1x8x32xbf16> to vector<8x32xbf16>
    %c0_2 = arith.constant 0 : index
    %c0_3 = arith.constant 0 : index
    %2 = vector.load %arg5[%c0_2, %c0_3] : memref<32x18xbf16, #tpu.memory_space<vmem>>, vector<32x18xbf16>
    %cst = arith.constant dense<0.000000e+00> : vector<8x18xf32>
    %3 = tpu.matmul %1, %2, %cst {dimension_numbers = #tpu.dot_dimension_numbers<[1], [0], [0], [1], [0, 0, 1, 1], [], []>} : vector<8x32xbf16>, vector<32x18xbf16>, vector<8x18xf32> -> vector<8x18xf32>
    %4 = vector.extract_strided_slice %3 {offsets = [0, 0], sizes = [8, 2], strides = [1, 1]} : vector<8x18xf32> to vector<8x2xf32>
    %c0_4 = arith.constant 0 : index
    %c0_5 = arith.constant 0 : index
    %5 = vector.load %arg6[%c0_4, %c0_5] : memref<1x2xf32, #tpu.memory_space<vmem>>, vector<1x2xf32>
    %6 = arith.mulf %4, %4 : vector<8x2xf32>
    %cst_6 = arith.constant dense<0.000000e+00> : vector<8xf32>
    %7 = vector.multi_reduction <add>, %6, %cst_6 [1] : vector<8x2xf32> to vector<8xf32>
    %8 = vector.shape_cast %7 : vector<8xf32> to vector<8x1xf32>
    %cst_7 = arith.constant 2.000000e+00 : f32
    %9 = vector.broadcast %cst_7 : f32 to vector<8x1xf32>
    %10 = arith.divf %8, %9 : vector<8x1xf32>
    %cst_8 = arith.constant 1.000000e-07 : f32
    %11 = vector.broadcast %cst_8 : f32 to vector<8x1xf32>
    %12 = arith.addf %10, %11 : vector<8x1xf32>
    %13 = math.rsqrt %12 : vector<8x1xf32>
    %14 = vector.broadcast %13 : vector<8x1xf32> to vector<8x2xf32>
    %15 = arith.mulf %4, %14 : vector<8x2xf32>
    %16 = vector.broadcast %5 : vector<1x2xf32> to vector<8x2xf32>
    %17 = arith.mulf %15, %16 : vector<8x2xf32>
    %18 = arith.truncf %17 : vector<8x2xf32> to vector<8x2xbf16>
    %19 = vector.extract_strided_slice %3 {offsets = [0, 2], sizes = [8, 8], strides = [1, 1]} : vector<8x18xf32> to vector<8x8xf32>
    %20 = vector.extract_strided_slice %3 {offsets = [0, 10], sizes = [8, 8], strides = [1, 1]} : vector<8x18xf32> to vector<8x8xf32>
    %c0_9 = arith.constant 0 : index
    %c0_10 = arith.constant 0 : index
    %c0_11 = arith.constant 0 : index
    %21 = vector.load %arg3[%c0_9, %c0_10, %c0_11] : memref<1x8x8xf32, #tpu.memory_space<vmem>>, vector<1x8x8xf32>
    %22 = vector.shape_cast %21 : vector<1x8x8xf32> to vector<8x8xf32>
    %23 = arith.mulf %19, %22 : vector<8x8xf32>
    %c0_12 = arith.constant 0 : index
    %c0_13 = arith.constant 0 : index
    %c0_14 = arith.constant 0 : index
    %24 = vector.load %arg4[%c0_12, %c0_13, %c0_14] : memref<1x8x8xf32, #tpu.memory_space<vmem>>, vector<1x8x8xf32>
    %25 = vector.shape_cast %24 : vector<1x8x8xf32> to vector<8x8xf32>
    %26 = arith.mulf %20, %25 : vector<8x8xf32>
    %27 = arith.addf %23, %26 : vector<8x8xf32>
    %28 = arith.truncf %27 : vector<8x8xf32> to vector<8x8xbf16>
    %c0_15 = arith.constant 0 : index
    %c0_16 = arith.constant 0 : index
    %29 = vector.load %arg7[%c0_15, %c0_16] : memref<2x128xbf16, #tpu.memory_space<vmem>>, vector<2x128xbf16>
    %cst_17 = arith.constant dense<0.000000e+00> : vector<8x128xf32>
    %30 = tpu.matmul %18, %29, %cst_17 {dimension_numbers = #tpu.dot_dimension_numbers<[1], [0], [0], [1], [0, 0, 1, 1], [], []>} : vector<8x2xbf16>, vector<2x128xbf16>, vector<8x128xf32> -> vector<8x128xf32>
    %31 = vector.extract_strided_slice %30 {offsets = [0, 0], sizes = [8, 64], strides = [1, 1]} : vector<8x128xf32> to vector<8x64xf32>
    %32 = arith.truncf %31 : vector<8x64xf32> to vector<8x64xbf16>
    %33 = vector.extract_strided_slice %30 {offsets = [0, 64], sizes = [8, 64], strides = [1, 1]} : vector<8x128xf32> to vector<8x64xf32>
    %34 = arith.truncf %33 : vector<8x64xf32> to vector<8x64xbf16>
    %35 = vector.extract_strided_slice %32 {offsets = [0, 0], sizes = [8, 16], strides = [1, 1]} : vector<8x64xbf16> to vector<8x16xbf16>
    %c0_18 = arith.constant 0 : index
    %c0_19 = arith.constant 0 : index
    %c0_20 = arith.constant 0 : index
    %c0_21 = arith.constant 0 : index
    %36 = vector.load %arg8[%c0_18, %c0_19, %c0_20, %c0_21] : memref<1x4x8x24xbf16, #tpu.memory_space<vmem>>, vector<1x1x8x16xbf16>
    %37 = vector.shape_cast %36 : vector<1x1x8x16xbf16> to vector<8x16xbf16>
    %38 = vector.shape_cast %35 : vector<8x16xbf16> to vector<1x1x8x16xbf16>
    tpu.vector_store %arg8[%c0_18, %c0_19, %c0_20, %c0_21], %38 {strides = array<i32>} : memref<1x4x8x24xbf16, #tpu.memory_space<vmem>>, vector<1x1x8x16xbf16>,
    %c0_22 = arith.constant 0 : index
    %c0_23 = arith.constant 0 : index
    %c0_24 = arith.constant 0 : index
    %c16 = arith.constant 16 : index
    %39 = vector.load %arg8[%c0_22, %c0_23, %c0_24, %c16] : memref<1x4x8x24xbf16, #tpu.memory_space<vmem>>, vector<1x1x8x8xbf16>
    %40 = vector.shape_cast %39 : vector<1x1x8x8xbf16> to vector<8x8xbf16>
    %41 = vector.shape_cast %28 : vector<8x8xbf16> to vector<1x1x8x8xbf16>
    tpu.vector_store %arg8[%c0_22, %c0_23, %c0_24, %c16], %41 {strides = array<i32>} : memref<1x4x8x24xbf16, #tpu.memory_space<vmem>>, vector<1x1x8x8xbf16>,
    %42 = vector.extract_strided_slice %34 {offsets = [0, 0], sizes = [8, 16], strides = [1, 1]} : vector<8x64xbf16> to vector<8x16xbf16>
    %c0_25 = arith.constant 0 : index
    %c0_26 = arith.constant 0 : index
    %c0_27 = arith.constant 0 : index
    %c0_28 = arith.constant 0 : index
    %43 = vector.load %arg9[%c0_25, %c0_26, %c0_27, %c0_28] : memref<1x4x8x16xbf16, #tpu.memory_space<vmem>>, vector<1x1x8x16xbf16>
    %44 = vector.shape_cast %43 : vector<1x1x8x16xbf16> to vector<8x16xbf16>
    %45 = vector.shape_cast %42 : vector<8x16xbf16> to vector<1x1x8x16xbf16>
    tpu.vector_store %arg9[%c0_25, %c0_26, %c0_27, %c0_28], %45 {strides = array<i32>} : memref<1x4x8x16xbf16, #tpu.memory_space<vmem>>, vector<1x1x8x16xbf16>,
    %46 = vector.extract_strided_slice %32 {offsets = [0, 16], sizes = [8, 16], strides = [1, 1]} : vector<8x64xbf16> to vector<8x16xbf16>
    %c0_29 = arith.constant 0 : index
    %c1 = arith.constant 1 : index
    %c0_30 = arith.constant 0 : index
    %c0_31 = arith.constant 0 : index
    %47 = vector.load %arg8[%c0_29, %c1, %c0_30, %c0_31] : memref<1x4x8x24xbf16, #tpu.memory_space<vmem>>, vector<1x1x8x16xbf16>
    %48 = vector.shape_cast %47 : vector<1x1x8x16xbf16> to vector<8x16xbf16>
    %49 = vector.shape_cast %46 : vector<8x16xbf16> to vector<1x1x8x16xbf16>
    tpu.vector_store %arg8[%c0_29, %c1, %c0_30, %c0_31], %49 {strides = array<i32>} : memref<1x4x8x24xbf16, #tpu.memory_space<vmem>>, vector<1x1x8x16xbf16>,
    %c0_32 = arith.constant 0 : index
    %c1_33 = arith.constant 1 : index
    %c0_34 = arith.constant 0 : index
    %c16_35 = arith.constant 16 : index
    %50 = vector.load %arg8[%c0_32, %c1_33, %c0_34, %c16_35] : memref<1x4x8x24xbf16, #tpu.memory_space<vmem>>, vector<1x1x8x8xbf16>
    %51 = vector.shape_cast %50 : vector<1x1x8x8xbf16> to vector<8x8xbf16>
    %52 = vector.shape_cast %28 : vector<8x8xbf16> to vector<1x1x8x8xbf16>
    tpu.vector_store %arg8[%c0_32, %c1_33, %c0_34, %c16_35], %52 {strides = array<i32>} : memref<1x4x8x24xbf16, #tpu.memory_space<vmem>>, vector<1x1x8x8xbf16>,
    %53 = vector.extract_strided_slice %34 {offsets = [0, 16], sizes = [8, 16], strides = [1, 1]} : vector<8x64xbf16> to vector<8x16xbf16>
    %c0_36 = arith.constant 0 : index
    %c1_37 = arith.constant 1 : index
    %c0_38 = arith.constant 0 : index
    %c0_39 = arith.constant 0 : index
    %54 = vector.load %arg9[%c0_36, %c1_37, %c0_38, %c0_39] : memref<1x4x8x16xbf16, #tpu.memory_space<vmem>>, vector<1x1x8x16xbf16>
    %55 = vector.shape_cast %54 : vector<1x1x8x16xbf16> to vector<8x16xbf16>
    %56 = vector.shape_cast %53 : vector<8x16xbf16> to vector<1x1x8x16xbf16>
    tpu.vector_store %arg9[%c0_36, %c1_37, %c0_38, %c0_39], %56 {strides = array<i32>} : memref<1x4x8x16xbf16, #tpu.memory_space<vmem>>, vector<1x1x8x16xbf16>,
    %57 = vector.extract_strided_slice %32 {offsets = [0, 32], sizes = [8, 16], strides = [1, 1]} : vector<8x64xbf16> to vector<8x16xbf16>
    %c0_40 = arith.constant 0 : index
    %c2 = arith.constant 2 : index
    %c0_41 = arith.constant 0 : index
    %c0_42 = arith.constant 0 : index
    %58 = vector.load %arg8[%c0_40, %c2, %c0_41, %c0_42] : memref<1x4x8x24xbf16, #tpu.memory_space<vmem>>, vector<1x1x8x16xbf16>
    %59 = vector.shape_cast %58 : vector<1x1x8x16xbf16> to vector<8x16xbf16>
    %60 = vector.shape_cast %57 : vector<8x16xbf16> to vector<1x1x8x16xbf16>
    tpu.vector_store %arg8[%c0_40, %c2, %c0_41, %c0_42], %60 {strides = array<i32>} : memref<1x4x8x24xbf16, #tpu.memory_space<vmem>>, vector<1x1x8x16xbf16>,
    %c0_43 = arith.constant 0 : index
    %c2_44 = arith.constant 2 : index
    %c0_45 = arith.constant 0 : index
    %c16_46 = arith.constant 16 : index
    %61 = vector.load %arg8[%c0_43, %c2_44, %c0_45, %c16_46] : memref<1x4x8x24xbf16, #tpu.memory_space<vmem>>, vector<1x1x8x8xbf16>
    %62 = vector.shape_cast %61 : vector<1x1x8x8xbf16> to vector<8x8xbf16>
    %63 = vector.shape_cast %28 : vector<8x8xbf16> to vector<1x1x8x8xbf16>
    tpu.vector_store %arg8[%c0_43, %c2_44, %c0_45, %c16_46], %63 {strides = array<i32>} : memref<1x4x8x24xbf16, #tpu.memory_space<vmem>>, vector<1x1x8x8xbf16>,
    %64 = vector.extract_strided_slice %34 {offsets = [0, 32], sizes = [8, 16], strides = [1, 1]} : vector<8x64xbf16> to vector<8x16xbf16>
    %c0_47 = arith.constant 0 : index
    %c2_48 = arith.constant 2 : index
    %c0_49 = arith.constant 0 : index
    %c0_50 = arith.constant 0 : index
    %65 = vector.load %arg9[%c0_47, %c2_48, %c0_49, %c0_50] : memref<1x4x8x16xbf16, #tpu.memory_space<vmem>>, vector<1x1x8x16xbf16>
    %66 = vector.shape_cast %65 : vector<1x1x8x16xbf16> to vector<8x16xbf16>
    %67 = vector.shape_cast %64 : vector<8x16xbf16> to vector<1x1x8x16xbf16>
    tpu.vector_store %arg9[%c0_47, %c2_48, %c0_49, %c0_50], %67 {strides = array<i32>} : memref<1x4x8x16xbf16, #tpu.memory_space<vmem>>, vector<1x1x8x16xbf16>,
    %68 = vector.extract_strided_slice %32 {offsets = [0, 48], sizes = [8, 16], strides = [1, 1]} : vector<8x64xbf16> to vector<8x16xbf16>
    %c0_51 = arith.constant 0 : index
    %c3 = arith.constant 3 : index
    %c0_52 = arith.constant 0 : index
    %c0_53 = arith.constant 0 : index
    %69 = vector.load %arg8[%c0_51, %c3, %c0_52, %c0_53] : memref<1x4x8x24xbf16, #tpu.memory_space<vmem>>, vector<1x1x8x16xbf16>
    %70 = vector.shape_cast %69 : vector<1x1x8x16xbf16> to vector<8x16xbf16>
    %71 = vector.shape_cast %68 : vector<8x16xbf16> to vector<1x1x8x16xbf16>
    tpu.vector_store %arg8[%c0_51, %c3, %c0_52, %c0_53], %71 {strides = array<i32>} : memref<1x4x8x24xbf16, #tpu.memory_space<vmem>>, vector<1x1x8x16xbf16>,
    %c0_54 = arith.constant 0 : index
    %c3_55 = arith.constant 3 : index
    %c0_56 = arith.constant 0 : index
    %c16_57 = arith.constant 16 : index
    %72 = vector.load %arg8[%c0_54, %c3_55, %c0_56, %c16_57] : memref<1x4x8x24xbf16, #tpu.memory_space<vmem>>, vector<1x1x8x8xbf16>
    %73 = vector.shape_cast %72 : vector<1x1x8x8xbf16> to vector<8x8xbf16>
    %74 = vector.shape_cast %28 : vector<8x8xbf16> to vector<1x1x8x8xbf16>
    tpu.vector_store %arg8[%c0_54, %c3_55, %c0_56, %c16_57], %74 {strides = array<i32>} : memref<1x4x8x24xbf16, #tpu.memory_space<vmem>>, vector<1x1x8x8xbf16>,
    %75 = vector.extract_strided_slice %34 {offsets = [0, 48], sizes = [8, 16], strides = [1, 1]} : vector<8x64xbf16> to vector<8x16xbf16>
    %c0_58 = arith.constant 0 : index
    %c3_59 = arith.constant 3 : index
    %c0_60 = arith.constant 0 : index
    %c0_61 = arith.constant 0 : index
    %76 = vector.load %arg9[%c0_58, %c3_59, %c0_60, %c0_61] : memref<1x4x8x16xbf16, #tpu.memory_space<vmem>>, vector<1x1x8x16xbf16>
    %77 = vector.shape_cast %76 : vector<1x1x8x16xbf16> to vector<8x16xbf16>
    %78 = vector.shape_cast %75 : vector<8x16xbf16> to vector<1x1x8x16xbf16>
    tpu.vector_store %arg9[%c0_58, %c3_59, %c0_60, %c0_61], %78 {strides = array<i32>} : memref<1x4x8x16xbf16, #tpu.memory_space<vmem>>, vector<1x1x8x16xbf16>,
    return
  }
  func.func @transform_0(%arg0: i32, %arg1: i32) -> (i32, i32, i32) {
    %c0_i32 = arith.constant 0 : i32
    %c0_i32_0 = arith.constant 0 : i32
    return %arg0, %arg1, %c0_i32 : i32, i32, i32
  }
  func.func @transform_1(%arg0: i32, %arg1: i32) -> (i32, i32, i32) {
    %c0_i32 = arith.constant 0 : i32
    %c0_i32_0 = arith.constant 0 : i32
    return %arg0, %arg1, %c0_i32 : i32, i32, i32
  }
  func.func @transform_2(%arg0: i32, %arg1: i32) -> (i32, i32, i32) {
    %c0_i32 = arith.constant 0 : i32
    %c0_i32_0 = arith.constant 0 : i32
    return %arg0, %arg1, %c0_i32 : i32, i32, i32
  }
  func.func @transform_3(%arg0: i32, %arg1: i32) -> (i32, i32) {
    %c0_i32 = arith.constant 0 : i32
    %c0_i32_0 = arith.constant 0 : i32
    %c0_i32_1 = arith.constant 0 : i32
    return %c0_i32, %c0_i32_0 : i32, i32
  }
  func.func @transform_4(%arg0: i32, %arg1: i32) -> (i32, i32) {
    %c0_i32 = arith.constant 0 : i32
    %c0_i32_0 = arith.constant 0 : i32
    %c0_i32_1 = arith.constant 0 : i32
    return %c0_i32, %c0_i32_0 : i32, i32
  }
  func.func @transform_5(%arg0: i32, %arg1: i32) -> (i32, i32) {
    %c0_i32 = arith.constant 0 : i32
    %c0_i32_0 = arith.constant 0 : i32
    %c0_i32_1 = arith.constant 0 : i32
    return %c0_i32, %c0_i32_0 : i32, i32
  }
  func.func @transform_6(%arg0: i32, %arg1: i32) -> (i32, i32, i32, i32) {
    %c0_i32 = arith.constant 0 : i32
    %c0_i32_0 = arith.constant 0 : i32
    %c0_i32_1 = arith.constant 0 : i32
    return %arg0, %c0_i32, %arg1, %c0_i32_0 : i32, i32, i32, i32
  }
  func.func @transform_7(%arg0: i32, %arg1: i32) -> (i32, i32, i32, i32) {
    %c0_i32 = arith.constant 0 : i32
    %c0_i32_0 = arith.constant 0 : i32
    %c0_i32_1 = arith.constant 0 : i32
    return %arg0, %c0_i32, %arg1, %c0_i32_0 : i32, i32, i32, i32
  }
}

</mosaic_0001>

<llo_original>
// kernel: tpu_custom_call.1
$region0: #{tpu_custom_call.1}
  #allocation0 [shape = 'u32[]', space=smem, size = 0x4, offset = 0x4, fixed_abs, tag = 'smem constant byte address 0x4 - core index']
  #allocation1 [shape = 'u32[72,128]{1,0:T(1,128)}', space=vmem, size = 0x9000, scoped, tag = 'internal scratch']
  %s0 = inlined_call_operand.vmem [shape: bf16[2,8,32], index: 0, kind: input, shape index: {}]
  %s1 = inlined_call_operand.vmem [shape: f32[2,8,8], index: 1, kind: input, shape index: {}]
  %s2 = inlined_call_operand.hbm [shape: f32[2,8,8], index: 2, kind: input, shape index: {}]
  %s3 = inlined_call_operand.vmem [shape: bf16[32,18], index: 3, kind: input, shape index: {}]
  %s4 = inlined_call_operand.vmem [shape: f32[1,2], index: 4, kind: input, shape index: {}]
  %s5 = inlined_call_operand.vmem [shape: bf16[2,128], index: 5, kind: input, shape index: {}]
  %s6 = inlined_call_operand.hbm [shape: bf16[2,4,8,24], index: 6, kind: output, shape index: {0}]
  %s7 = inlined_call_operand.hbm [shape: bf16[2,4,8,16], index: 7, kind: output, shape index: {1}]
  %8 = xla_tuple %s6, %s7
  %s9 = sld [smem:[#allocation0]]
  $region69: #{tpu_custom_call.1} parent=0
    _
  %s11 = ssub.s32 1, %s9
  %s12 = scalar_select 0, %s11, %s9
  $region1: #{tpu_custom_call.1} parent=0
    #allocation2 [shape = 'u8[8192]{0}', space=vmem, size = 0x2000, scoped, tag = 'input window, operand 2']
    #allocation3 [shape = 's32[2]{0}', space=sflag, size = 0x8, scoped, tag = 'scoped memory for tpu_custom_call.1']
    #allocation4 [shape = 's32[2]{0}', space=sflag, size = 0x8, scoped, tag = 'scoped memory for tpu_custom_call.1']
    #allocation5 [shape = 'u8[16384]{0}', space=vmem, size = 0x4000, scoped, tag = 'output window, operand 0']
    #allocation6 [shape = 'u8[16384]{0}', space=vmem, size = 0x4000, scoped, tag = 'output window, operand 1']
    #allocation7 [shape = 's32[2]{0}', space=sflag, size = 0x8, scoped, tag = 'scoped memory for tpu_custom_call.1']
    %13 = vsyncpa [#allocation3], 0
    %s14 = scalar_lea.sflag [#allocation3], 1
    %15 = vsyncpa %s14, 0
    %16 = vsyncpa [#allocation4], 0
    %s17 = scalar_lea.sflag [#allocation4], 1
    %18 = vsyncpa %s17, 0
    %19 = vsyncpa [#allocation7], 0
    %s20 = scalar_lea.sflag [#allocation7], 1
    %21 = vsyncpa %s20, 0
    loop: start=0, step=1, limit=4
    $region2: #{tpu_custom_call.1} parent=1 // loop_pre_header
      _
    $region3: #{tpu_custom_call.1} parent=1 // loop_header
      %s23 = sphi 0, %s27
      %p24 = scmp.ge.s32.totalorder %s23, 4
      %s30 = sphi 0, %s42
      %s31 = sphi 0, %s38
      %s32 = sphi 0, %s30
      %s33 = sphi 0, %s31
      %s34 = sphi 0, %s32
      %s35 = sphi 0, %s33
      %s47 = sphi 0, %s49
      %s50 = sphi 0, %s47
      %s51 = sphi 0, %s50
      %s67 = sphi 0, %s51
      %s75 = sphi 0, %s77
      %s78 = sphi 0, %s75
      %s79 = sphi 0, %s78
      %s95 = sphi 0, %s79
      %s103 = sphi 0, %s105
      %s106 = sphi 0, %s103
      %s107 = sphi 0, %s106
      %s123 = sphi 0, %s107
      %s127 = sphi 0, %s127
      %s129 = sphi 0, %s127
      %s130 = sphi 0, %s129
      %s144 = sphi 0, %s130
      %s148 = sphi 0, %s148
      %s150 = sphi 0, %s148
      %s151 = sphi 0, %s150
      %s165 = sphi 0, %s151
      %s169 = sphi 0, %s169
      %s171 = sphi 0, %s169
      %s172 = sphi 0, %s171
      %s186 = sphi 0, %s172
      %s194 = sphi 0, %s196
      %s197 = sphi 0, %s194
      %s198 = sphi 0, %s197
      %s214 = sphi 0, %s198
      %s222 = sphi 0, %s224
      %s225 = sphi 0, %s222
      %s226 = sphi 0, %s225
      %s242 = sphi 0, %s226
    $region4: #{tpu_custom_call.1} parent=1 // loop_header_branch
      %26 = sbr.rel (%p24) target = $region8
    $region5: #{tpu_custom_call.1} parent=1 // loop_body
      %s28 = ssub.s32 %s23, 1
      %s29 = ssub.s32 %s23, 2
      %s36 = sadd.s32 1, %s31
      %p37 = scmp.ge.s32.totalorder %s36, 1
      %s38 = scalar_select %p37, 0, %s36
      %s39 = sadd.s32 1, %s30
      %s40 = scalar_select %p37, %s39, %s30
      %p41 = scmp.ge.s32.totalorder %s40, 2
      %s42 = scalar_select %p41, 0, %s40
      %s43 = ssub.s32 %s30, %s42
      %s44 = ssub.s32 %s31, %s38
      %s45 = sor.u32 %s43, %s44
      %p46 = scmp.eq.s32.totalorder %s45, 0
      %s48 = sadd.s32 %s47, 1
      %s49 = scalar_select %p46, %s47, %s48
      %p52 = pneg %p46
      %p53 = scmp.eq.s32.totalorder %s23, 1
      %p54 = por %p52, %p53
      %p55 = scmp.ne.s32.totalorder %s47, %s50
      %p56 = scmp.eq.s32.totalorder %s23, 0
      %p57 = por %p55, %p56
      %p58 = scmp.ne.s32.totalorder %s47, %s50
      %p59 = scmp.eq.s32.totalorder %s28, 1
      %p60 = por %p58, %p59
      %p61 = scmp.ne.s32.totalorder %s50, %s51
      %p62 = scmp.eq.s32.totalorder %s28, 0
      %p63 = por %p61, %p62
      %p64 = scmp.ne.s32.totalorder %s50, %s51
      %p65 = scmp.eq.s32.totalorder %s29, 1
      %p66 = por %p64, %p65
      %p68 = scmp.ne.s32.totalorder %s51, %s67
      %p69 = scmp.eq.s32.totalorder %s29, 0
      %p70 = por %p68, %p69
      %s71 = ssub.s32 %s30, %s42
      %s72 = ssub.s32 %s31, %s38
      %s73 = sor.u32 %s71, %s72
      %p74 = scmp.eq.s32.totalorder %s73, 0
      %s76 = sadd.s32 %s75, 1
      %s77 = scalar_select %p74, %s75, %s76
      %p80 = pneg %p74
      %p81 = scmp.eq.s32.totalorder %s23, 1
      %p82 = por %p80, %p81
      %p83 = scmp.ne.s32.totalorder %s75, %s78
      %p84 = scmp.eq.s32.totalorder %s23, 0
      %p85 = por %p83, %p84
      %p86 = scmp.ne.s32.totalorder %s75, %s78
      %p87 = scmp.eq.s32.totalorder %s28, 1
      %p88 = por %p86, %p87
      %p89 = scmp.ne.s32.totalorder %s78, %s79
      %p90 = scmp.eq.s32.totalorder %s28, 0
      %p91 = por %p89, %p90
      %p92 = scmp.ne.s32.totalorder %s78, %s79
      %p93 = scmp.eq.s32.totalorder %s29, 1
      %p94 = por %p92, %p93
      %p96 = scmp.ne.s32.totalorder %s79, %s95
      %p97 = scmp.eq.s32.totalorder %s29, 0
      %p98 = por %p96, %p97
      %s99 = ssub.s32 %s30, %s42
      %s100 = ssub.s32 %s31, %s38
      %s101 = sor.u32 %s99, %s100
      %p102 = scmp.eq.s32.totalorder %s101, 0
      %s104 = sadd.s32 %s103, 1
      %s105 = scalar_select %p102, %s103, %s104
      %p108 = pneg %p102
      %p109 = scmp.eq.s32.totalorder %s23, 1
      %p110 = por %p108, %p109
      %p111 = scmp.ne.s32.totalorder %s103, %s106
      %p112 = scmp.eq.s32.totalorder %s23, 0
      %p113 = por %p111, %p112
      %p114 = scmp.ne.s32.totalorder %s103, %s106
      %p115 = scmp.eq.s32.totalorder %s28, 1
      %p116 = por %p114, %p115
      %p117 = scmp.ne.s32.totalorder %s106, %s107
      %p118 = scmp.eq.s32.totalorder %s28, 0
      %p119 = por %p117, %p118
      %p120 = scmp.ne.s32.totalorder %s106, %s107
      %p121 = scmp.eq.s32.totalorder %s29, 1
      %p122 = por %p120, %p121
      %p124 = scmp.ne.s32.totalorder %s107, %s123
      %p125 = scmp.eq.s32.totalorder %s29, 0
      %p126 = por %p124, %p125
      %s128 = sadd.s32 %s127, 1
      %p131 = scmp.eq.s32.totalorder %s23, 1
      %p132 = scmp.ne.s32.totalorder %s127, %s129
      %p133 = scmp.eq.s32.totalorder %s23, 0
      %p134 = por %p132, %p133
      %p135 = scmp.ne.s32.totalorder %s127, %s129
      %p136 = scmp.eq.s32.totalorder %s28, 1
      %p137 = por %p135, %p136
      %p138 = scmp.ne.s32.totalorder %s129, %s130
      %p139 = scmp.eq.s32.totalorder %s28, 0
      %p140 = por %p138, %p139
      %p141 = scmp.ne.s32.totalorder %s129, %s130
      %p142 = scmp.eq.s32.totalorder %s29, 1
      %p143 = por %p141, %p142
      %p145 = scmp.ne.s32.totalorder %s130, %s144
      %p146 = scmp.eq.s32.totalorder %s29, 0
      %p147 = por %p145, %p146
      %s149 = sadd.s32 %s148, 1
      %p152 = scmp.eq.s32.totalorder %s23, 1
      %p153 = scmp.ne.s32.totalorder %s148, %s150
      %p154 = scmp.eq.s32.totalorder %s23, 0
      %p155 = por %p153, %p154
      %p156 = scmp.ne.s32.totalorder %s148, %s150
      %p157 = scmp.eq.s32.totalorder %s28, 1
      %p158 = por %p156, %p157
      %p159 = scmp.ne.s32.totalorder %s150, %s151
      %p160 = scmp.eq.s32.totalorder %s28, 0
      %p161 = por %p159, %p160
      %p162 = scmp.ne.s32.totalorder %s150, %s151
      %p163 = scmp.eq.s32.totalorder %s29, 1
      %p164 = por %p162, %p163
      %p166 = scmp.ne.s32.totalorder %s151, %s165
      %p167 = scmp.eq.s32.totalorder %s29, 0
      %p168 = por %p166, %p167
      %s170 = sadd.s32 %s169, 1
      %p173 = scmp.eq.s32.totalorder %s23, 1
      %p174 = scmp.ne.s32.totalorder %s169, %s171
      %p175 = scmp.eq.s32.totalorder %s23, 0
      %p176 = por %p174, %p175
      %p177 = scmp.ne.s32.totalorder %s169, %s171
      %p178 = scmp.eq.s32.totalorder %s28, 1
      %p179 = por %p177, %p178
      %p180 = scmp.ne.s32.totalorder %s171, %s172
      %p181 = scmp.eq.s32.totalorder %s28, 0
      %p182 = por %p180, %p181
      %p183 = scmp.ne.s32.totalorder %s171, %s172
      %p184 = scmp.eq.s32.totalorder %s29, 1
      %p185 = por %p183, %p184
      %p187 = scmp.ne.s32.totalorder %s172, %s186
      %p188 = scmp.eq.s32.totalorder %s29, 0
      %p189 = por %p187, %p188
      %s190 = ssub.s32 %s30, %s42
      %s191 = ssub.s32 %s31, %s38
      %s192 = sor.u32 %s190, %s191
      %p193 = scmp.eq.s32.totalorder %s192, 0
      %s195 = sadd.s32 %s194, 1
      %s196 = scalar_select %p193, %s194, %s195
      %p199 = pneg %p193
      %p200 = scmp.eq.s32.totalorder %s23, 1
      %p201 = por %p199, %p200
      %p202 = scmp.ne.s32.totalorder %s194, %s197
      %p203 = scmp.eq.s32.totalorder %s23, 0
      %p204 = por %p202, %p203
      %p205 = scmp.ne.s32.totalorder %s194, %s197
      %p206 = scmp.eq.s32.totalorder %s28, 1
      %p207 = por %p205, %p206
      %p208 = scmp.ne.s32.totalorder %s197, %s198
      %p209 = scmp.eq.s32.totalorder %s28, 0
      %p210 = por %p208, %p209
      %p211 = scmp.ne.s32.totalorder %s197, %s198
      %p212 = scmp.eq.s32.totalorder %s29, 1
      %p213 = por %p211, %p212
      %p215 = scmp.ne.s32.totalorder %s198, %s214
      %p216 = scmp.eq.s32.totalorder %s29, 0
      %p217 = por %p215, %p216
      %s218 = ssub.s32 %s30, %s42
      %s219 = ssub.s32 %s31, %s38
      %s220 = sor.u32 %s218, %s219
      %p221 = scmp.eq.s32.totalorder %s220, 0
      %s223 = sadd.s32 %s222, 1
      %s224 = scalar_select %p221, %s222, %s223
      %p227 = pneg %p221
      %p228 = scmp.eq.s32.totalorder %s23, 1
      %p229 = por %p227, %p228
      %p230 = scmp.ne.s32.totalorder %s222, %s225
      %p231 = scmp.eq.s32.totalorder %s23, 0
      %p232 = por %p230, %p231
      %p233 = scmp.ne.s32.totalorder %s222, %s225
      %p234 = scmp.eq.s32.totalorder %s28, 1
      %p235 = por %p233, %p234
      %p236 = scmp.ne.s32.totalorder %s225, %s226
      %p237 = scmp.eq.s32.totalorder %s28, 0
      %p238 = por %p236, %p237
      %p239 = scmp.ne.s32.totalorder %s225, %s226
      %p240 = scmp.eq.s32.totalorder %s29, 1
      %p241 = por %p239, %p240
      %p243 = scmp.ne.s32.totalorder %s226, %s242
      %p244 = scmp.eq.s32.totalorder %s29, 0
      %p245 = por %p243, %p244
      %p246 = scmp.le.s32.totalorder 1, %s23
      %p247 = scmp.lt.s32.totalorder %s23, 3
      %p248 = pnand %p246, %p247
      %p249 = pneg %p248
      // Predicated region
      $region9: #{tpu_custom_call.1} parent=5 // pred_check
        _
      $region10: #{tpu_custom_call.1} parent=5 // pred_check_branch
        %251 = sbr.rel (%p248) target = $region12
      $region11: #{tpu_custom_call.1} parent=5 // pred_region
        %s252 = ssub.s32 %s23, 1
        // Predicated region
        $region13: #{tpu_custom_call.1} parent=11 // pred_check
          %p253 = pneg %p140
        $region14: #{tpu_custom_call.1} parent=11 // pred_check_branch
          %255 = sbr.rel (%p253) target = $region16
        $region15: #{tpu_custom_call.1} parent=11 // pred_region
          _
        $region16: #{tpu_custom_call.1} parent=11 // pred_fallthru
          _
        // Predicated region
        $region17: #{tpu_custom_call.1} parent=11 // pred_check
          %p256 = pneg %p161
        $region18: #{tpu_custom_call.1} parent=11 // pred_check_branch
          %258 = sbr.rel (%p256) target = $region20
        $region19: #{tpu_custom_call.1} parent=11 // pred_region
          _
        $region20: #{tpu_custom_call.1} parent=11 // pred_fallthru
          _
        // Predicated region
        $region21: #{tpu_custom_call.1} parent=11 // pred_check
          %p259 = pneg %p182
        $region22: #{tpu_custom_call.1} parent=11 // pred_check_branch
          %261 = sbr.rel (%p259) target = $region24
        $region23: #{tpu_custom_call.1} parent=11 // pred_region
          _
        $region24: #{tpu_custom_call.1} parent=11 // pred_fallthru
          _
      $region12: #{tpu_custom_call.1} parent=5 // pred_fallthru
        _
      %p262 = scmp.lt.s32.totalorder %s23, 2
      // Predicated region
      $region25: #{tpu_custom_call.1} parent=5 // pred_check
        %p263 = pneg %p262
      $region26: #{tpu_custom_call.1} parent=5 // pred_check_branch
        %265 = sbr.rel (%p263) target = $region28
      $region27: #{tpu_custom_call.1} parent=5 // pred_region
        // Predicated region
        $region29: #{tpu_custom_call.1} parent=27 // pred_check
          %p266 = pneg %p57
        $region30: #{tpu_custom_call.1} parent=27 // pred_check_branch
          %268 = sbr.rel (%p266) target = $region32
        $region31: #{tpu_custom_call.1} parent=27 // pred_region
          %p269 = scmp.lt.s32.totalorder %s30, 1
          %s270 = scalar_select %p269, %s30, 1
          %p271 = scmp.lt.s32.totalorder %s31, 0
          %s272 = scalar_select %p271, %s31, 0
          %s273 = sadd.s32 %s272, %s270
          %s274 = smul.addr %s273, 4
          %s275 = scalar_lea.vmem %s0, %s274
        $region32: #{tpu_custom_call.1} parent=27 // pred_fallthru
          _
        // Predicated region
        $region33: #{tpu_custom_call.1} parent=27 // pred_check
          %p276 = pneg %p85
        $region34: #{tpu_custom_call.1} parent=27 // pred_check_branch
          %278 = sbr.rel (%p276) target = $region36
        $region35: #{tpu_custom_call.1} parent=27 // pred_region
          %p279 = scmp.lt.s32.totalorder %s30, 1
          %s280 = scalar_select %p279, %s30, 1
          %p281 = scmp.lt.s32.totalorder %s31, 0
          %s282 = scalar_select %p281, %s31, 0
          %s283 = sadd.s32 %s282, %s280
          %s284 = smul.addr %s283, 8
          %s285 = scalar_lea.vmem %s1, %s284
        $region36: #{tpu_custom_call.1} parent=27 // pred_fallthru
          _
        // Predicated region
        $region37: #{tpu_custom_call.1} parent=27 // pred_check
          %p286 = pneg %p113
        $region38: #{tpu_custom_call.1} parent=27 // pred_check_branch
          %288 = sbr.rel (%p286) target = $region40
        $region39: #{tpu_custom_call.1} parent=27 // pred_region
          %s289 = sand.u32 %s103, 1
          %s290 = scalar_lea.sflag [#allocation3], %s289
          %s291 = sand.u32 %s103, 1
          %s292 = smul.addr %s291, 8
          %s293 = scalar_lea.vmem [#allocation2], %s292
          %295 = vsyncadd %s290, 0
          %s296 = sadd.s32 %s31, %s30
          %s297 = smul.addr %s296, 8
          %s298 = scalar_lea.hbm %s2, %s297
          %s300 = sshll.u32 %s298, 4
          %s301 = int_to_ptr.hbm [resolvable:$true] %s300
          %s302 = sshll.u32 %s293, 4
          %s303 = int_to_ptr.vmem [resolvable:$true] %s302
          %305 = dma.hbm_to_vmem [thread:$0]  %s301, 128, %s303, %s290
        $region40: #{tpu_custom_call.1} parent=27 // pred_fallthru
          _
      $region28: #{tpu_custom_call.1} parent=5 // pred_fallthru
        _
      %p306 = scmp.le.s32.totalorder 1, %s23
      %p307 = scmp.lt.s32.totalorder %s23, 3
      %p308 = pnand %p306, %p307
      %p309 = pneg %p308
      // Predicated region
      $region41: #{tpu_custom_call.1} parent=5 // pred_check
        _
      $region42: #{tpu_custom_call.1} parent=5 // pred_check_branch
        %311 = sbr.rel (%p308) target = $region44
      $region43: #{tpu_custom_call.1} parent=5 // pred_region
        %s312 = ssub.s32 %s23, 1
        %s313 = sand.u32 %s106, 1
        %s314 = scalar_lea.sflag [#allocation3], %s313
        %s315 = sand.u32 %s106, 1
        %s316 = smul.addr %s315, 8
        %s317 = scalar_lea.vmem [#allocation2], %s316
        // Predicated region
        $region45: #{tpu_custom_call.1} parent=43 // pred_check
          %p318 = pneg %p119
        $region46: #{tpu_custom_call.1} parent=43 // pred_check_branch
          %320 = sbr.rel (%p318) target = $region48
        $region47: #{tpu_custom_call.1} parent=43 // pred_region
          %322 = dma.done %s314, 128
        $region48: #{tpu_custom_call.1} parent=43 // pred_fallthru
          _
        %p323 = scmp.lt.s32.totalorder %s32, 1
        %s324 = scalar_select %p323, %s32, 1
        %p325 = scmp.lt.s32.totalorder %s33, 0
        %s326 = scalar_select %p325, %s33, 0
        %s327 = sadd.s32 %s326, %s324
        %s328 = smul.addr %s327, 4
        %s329 = scalar_lea.vmem %s0, %s328
        %p330 = pneg %p63
        %p331 = pneg %p60
        %p332 = scmp.lt.s32.totalorder %s32, 1
        %s333 = scalar_select %p332, %s32, 1
        %p334 = scmp.lt.s32.totalorder %s33, 0
        %s335 = scalar_select %p334, %s33, 0
        %s336 = sadd.s32 %s335, %s333
        %s337 = smul.addr %s336, 8
        %s338 = scalar_lea.vmem %s1, %s337
        %p339 = pneg %p91
        %p340 = pneg %p88
        %s341 = sand.u32 %s106, 1
        %s342 = scalar_lea.sflag [#allocation3], %s341
        %s343 = sand.u32 %s106, 1
        %s344 = smul.addr %s343, 8
        %s345 = scalar_lea.vmem [#allocation2], %s344
        %p346 = pneg %p119
        %p347 = pneg %p116
        %p348 = pneg %p140
        %p349 = pneg %p137
        %p350 = pneg %p161
        %p351 = pneg %p158
        %p352 = pneg %p182
        %p353 = pneg %p179
        %p354 = pneg %p210
        %p355 = pneg %p207
        %s356 = sand.u32 %s197, 1
        %s357 = scalar_lea.sflag [#allocation4], %s356
        %s358 = sand.u32 %s197, 1
        %s359 = smul.addr %s358, 16
        %s360 = scalar_lea.vmem [#allocation5], %s359
        %p361 = pneg %p238
        %p362 = pneg %p235
        %s363 = sand.u32 %s225, 1
        %s364 = scalar_lea.sflag [#allocation7], %s363
        %s365 = sand.u32 %s225, 1
        %s366 = smul.addr %s365, 16
        %s367 = scalar_lea.vmem [#allocation6], %s366
        %p368 = scmp.lt.s32.totalorder %s32, 1
        %s369 = scalar_select %p368, %s32, 1
        %p370 = scmp.lt.s32.totalorder %s33, 0
        %s371 = scalar_select %p370, %s33, 0
        %s372 = sadd.s32 %s371, %s369
        %s373 = smul.addr %s372, 4
        %s374 = scalar_lea.vmem %s0, %s373
        %p375 = scmp.lt.s32.totalorder %s32, 1
        %s376 = scalar_select %p375, %s32, 1
        %p377 = scmp.lt.s32.totalorder %s33, 0
        %s378 = scalar_select %p377, %s33, 0
        %s379 = sadd.s32 %s378, %s376
        %s380 = smul.addr %s379, 8
        %s381 = scalar_lea.vmem %s1, %s380
        %v383 = vld [vmem:[%s374] sm:$0xf]
        %v384 = vld [vmem:[%s3] sm:$0xf]
        %v385 = vld [vmem:[%s3 + $0x4] sm:$0xf]
        %v386 = vld [vmem:[%s3 + $0x8] sm:$0xf]
        %v387 = vld [vmem:[%s3 + $0xc] sm:$0xf]
        %v392 = vunpack.c.l.b16 %v384
        %v393 = vunpack.c.l.b16 %v385
        %v394 = vunpack.c.l.b16 %v386
        %v395 = vunpack.c.l.b16 %v387
        %v396 = vpack.c.b16 %v393, %v392
        %v397 = vpack.c.b16 %v395, %v394
        %vm400 = vcmask 261120
        %v402 = vsel %vm400, %v383, 0
        %404 = vmatpush.bf16.msra.mxu0 0
        %405 = vmatpush.bf16.msra.mxu0 0
        %406 = vmatpush.bf16.msra.mxu0 0
        %407 = vmatpush.bf16.msra.mxu0 0
        %408 = vmatpush.bf16.msra.mxu0 0
        %409 = vmatpush.bf16.msra.mxu0 0
        %410 = vmatpush.bf16.msra.mxu0 %v397
        %411 = vmatpush.bf16.msra.mxu0 %v396
        %412 = vmatmul.bf16.gmra.mxu0 %v402
        %v413 = vpop.f32.mrf.mxu0
        %v414 = vadd.f32 0.0, %v413
        %v415 = vpop.f32.mrf.mxu0
        %416 = vdwg.mxu0
        %v417 = vld [vmem:[%s4] sm:$0x1]
        %v418 = vmul.f32 %v414, %v414
        %vm419 = vcmask 15360
        %v420 = vsel %vm419, %v418, 0.0
        %421 = vadd.xlane.f32.xlu0 %v420
        %v422 = vpop.xlane.xlu0 %421
        %v423 = vrcp.pop 2.0
        %v424 = vmul.f32 2.0, %v423
        %v425 = vsub.f32 1.0, %v424
        %v426 = vmul.f32 %v423, %v425
        %v427 = vadd.f32 %v423, %v426
        %vm428 = vweird.f32 %v423
        %v429 = vsel %vm428, %v423, %v427
        %v430 = vmul.f32 %v422, %v429
        %v431 = vadd.f32 %v430, 1e-07
        %v432 = vrsqrt.pop %v431
        %v433 = vmul.f32 %v432, %v431
        %v434 = vmul.f32 %v433, %v432
        %v435 = vmul.f32 0.5, %v434
        %v436 = vsub.f32 1.5, %v435
        %v437 = vmul.f32 %v432, %v436
        %vm438 = vweird.f32 %v431
        %vm439 = vweird.f32 %v432
        %vm440 = vmor %vm438, %vm439
        %v441 = vsel %vm440, %v432, %v437
        %v442 = vmul.f32 %v414, %v441
        %v444 = vperm.slane %v417, 0
        %v446 = vmul.f32 %v442, %v444
        %v447 = vpack.c.bf16 %v446, %v446
        %v448 = vld [vmem:[%s381] sm:$0xff]
        %450 = vrot.lane.b32.xlu0 %v448, 2
        %v451 = vpop.permute.xlu0 %450
        %v453 = vmul.f32 %v414, %v451
        %v454 = vld [vmem:[%s317] sm:$0xff]
        %456 = vrot.lane.b32.xlu0 %v454, 10
        %v457 = vpop.permute.xlu0 %456
        %v459 = vmul.f32 %v414, %v457
        %461 = vrot.lane.b32.xlu0 %v459, 120
        %v462 = vpop.permute.xlu0 %461
        %v464 = vadd.f32 %v453, %v462
        %v465 = vpack.c.bf16 %v464, %v464
        %v466 = vld [vmem:[%s5] sm:$0x1]
        %v468 = vsel %vm419, %v447, 0
        %vm470 = vcmask 1040384
        %v472 = vsel %vm470, %v466, 0
        %474 = vmatpush.bf16.msra.mxu0 0
        %475 = vmatpush.bf16.msra.mxu0 0
        %476 = vmatpush.bf16.msra.mxu0 0
        %477 = vmatpush.bf16.msra.mxu0 0
        %478 = vmatpush.bf16.msra.mxu0 0
        %479 = vmatpush.bf16.msra.mxu0 0
        %480 = vmatpush.bf16.msra.mxu0 0
        %481 = vmatpush.bf16.msra.mxu0 %v472
        %482 = vmatmul.bf16.gmra.mxu0 %v468
        %v483 = vpop.f32.mrf.mxu0
        %v484 = vadd.f32 0.0, %v483
        %v485 = vpop.f32.mrf.mxu0
        %486 = vdwg.mxu0
        %v487 = vpack.c.bf16 %v484, %v484
        %vm488 = vcmask 125952
        %489 = vst.msk [vmem:[%s360] sm:$0xf] %vm488, %v487
        %491 = vrot.lane.b32.xlu0 %v465, 14
        %v492 = vpop.permute.xlu0 %491
        %vm494 = vcmask 191616
        %495 = vst.msk [vmem:[%s360] sm:$0xf] %vm494, %v492
        %497 = vrot.lane.b32.xlu0 %v487, 64
        %v498 = vpop.permute.xlu0 %497
        %500 = vst.msk [vmem:[%s367] sm:$0xf] %vm488, %v498
        %501 = vrot.lane.b32.xlu0 %v487, 112
        %v502 = vpop.permute.xlu0 %501
        %s504 = scalar_lea.vmem %s360, 4 [#allocation5]
        %505 = vst.msk [vmem:[%s504] sm:$0xf] %vm488, %v502
        %506 = vst.msk [vmem:[%s504] sm:$0xf] %vm494, %v492
        %507 = vrot.lane.b32.xlu0 %v487, 48
        %v508 = vpop.permute.xlu0 %507
        %s510 = scalar_lea.vmem %s367, 4 [#allocation6]
        %511 = vst.msk [vmem:[%s510] sm:$0xf] %vm488, %v508
        %512 = vrot.lane.b32.xlu0 %v487, 96
        %v513 = vpop.permute.xlu0 %512
        %s515 = scalar_lea.vmem %s360, 8 [#allocation5]
        %516 = vst.msk [vmem:[%s515] sm:$0xf] %vm488, %v513
        %517 = vst.msk [vmem:[%s515] sm:$0xf] %vm494, %v492
        %518 = vrot.lane.b32.xlu0 %v487, 32
        %v519 = vpop.permute.xlu0 %518
        %s521 = scalar_lea.vmem %s367, 8 [#allocation6]
        %522 = vst.msk [vmem:[%s521] sm:$0xf] %vm488, %v519
        %523 = vrot.lane.b32.xlu0 %v487, 80
        %v524 = vpop.permute.xlu0 %523
        %s526 = scalar_lea.vmem %s360, 12 [#allocation5]
        %527 = vst.msk [vmem:[%s526] sm:$0xf] %vm488, %v524
        %528 = vst.msk [vmem:[%s526] sm:$0xf] %vm494, %v492
        %529 = vrot.lane.b32.xlu0 %v487, 16
        %v530 = vpop.permute.xlu0 %529
        %s532 = scalar_lea.vmem %s367, 12 [#allocation6]
        %533 = vst.msk [vmem:[%s532] sm:$0xf] %vm488, %v530
        %s534 = sand.u32 %s197, 1
        %s535 = scalar_lea.sflag [#allocation4], %s534
        %s536 = sand.u32 %s197, 1
        %s537 = smul.addr %s536, 16
        %s538 = scalar_lea.vmem [#allocation5], %s537
        %s539 = sand.u32 %s225, 1
        %s540 = scalar_lea.sflag [#allocation7], %s539
        %s541 = sand.u32 %s225, 1
        %s542 = smul.addr %s541, 16
        %s543 = scalar_lea.vmem [#allocation6], %s542
        // Predicated region
        $region49: #{tpu_custom_call.1} parent=43 // pred_check
          %p544 = pneg %p207
        $region50: #{tpu_custom_call.1} parent=43 // pred_check_branch
          %546 = sbr.rel (%p544) target = $region52
        $region51: #{tpu_custom_call.1} parent=43 // pred_region
          %548 = vsyncadd %s535, 0
          %s549 = smul.addr %s32, 4
          %s550 = sadd.s32 %s33, %s549
          %s551 = smul.addr %s550, 4
          %s552 = scalar_lea.hbm %s6, %s551
          %s553 = sshll.u32 %s538, 4
          %s554 = int_to_ptr.vmem [resolvable:$true] %s553
          %s555 = sshll.u32 %s552, 4
          %s556 = int_to_ptr.hbm [resolvable:$true] %s555
          %561 = dma.vmem_to_hbm [thread:$0]  %s554, 256, %s556, %s535, 64, 64, 4
        $region52: #{tpu_custom_call.1} parent=43 // pred_fallthru
          _
        // Predicated region
        $region53: #{tpu_custom_call.1} parent=43 // pred_check
          %p562 = pneg %p235
        $region54: #{tpu_custom_call.1} parent=43 // pred_check_branch
          %564 = sbr.rel (%p562) target = $region56
        $region55: #{tpu_custom_call.1} parent=43 // pred_region
          %566 = vsyncadd %s540, 0
          %s567 = smul.addr %s32, 4
          %s568 = sadd.s32 %s33, %s567
          %s569 = smul.addr %s568, 4
          %s570 = scalar_lea.hbm %s7, %s569
          %s571 = sshll.u32 %s543, 4
          %s572 = int_to_ptr.vmem [resolvable:$true] %s571
          %s573 = sshll.u32 %s570, 4
          %s574 = int_to_ptr.hbm [resolvable:$true] %s573
          %579 = dma.vmem_to_hbm [thread:$0]  %s572, 256, %s574, %s540, 64, 64, 4
        $region56: #{tpu_custom_call.1} parent=43 // pred_fallthru
          _
      $region44: #{tpu_custom_call.1} parent=5 // pred_fallthru
        _
      %p580 = scmp.le.s32.totalorder 2, %s23
      // Predicated region
      $region57: #{tpu_custom_call.1} parent=5 // pred_check
        %p581 = pneg %p580
      $region58: #{tpu_custom_call.1} parent=5 // pred_check_branch
        %583 = sbr.rel (%p581) target = $region60
      $region59: #{tpu_custom_call.1} parent=5 // pred_region
        %s584 = ssub.s32 %s23, 2
        // Predicated region
        $region61: #{tpu_custom_call.1} parent=59 // pred_check
          %p585 = pneg %p213
        $region62: #{tpu_custom_call.1} parent=59 // pred_check_branch
          %587 = sbr.rel (%p585) target = $region64
        $region63: #{tpu_custom_call.1} parent=59 // pred_region
          %s588 = sand.u32 %s198, 1
          %s589 = scalar_lea.sflag [#allocation4], %s588
          %s590 = sand.u32 %s198, 1
          %s591 = smul.addr %s590, 16
          %s592 = scalar_lea.vmem [#allocation5], %s591
          %594 = dma.done %s589, 256
        $region64: #{tpu_custom_call.1} parent=59 // pred_fallthru
          _
        // Predicated region
        $region65: #{tpu_custom_call.1} parent=59 // pred_check
          %p595 = pneg %p241
        $region66: #{tpu_custom_call.1} parent=59 // pred_check_branch
          %597 = sbr.rel (%p595) target = $region68
        $region67: #{tpu_custom_call.1} parent=59 // pred_region
          %s598 = sand.u32 %s226, 1
          %s599 = scalar_lea.sflag [#allocation7], %s598
          %s600 = sand.u32 %s226, 1
          %s601 = smul.addr %s600, 16
          %s602 = scalar_lea.vmem [#allocation6], %s601
          %604 = dma.done %s599, 256
        $region68: #{tpu_custom_call.1} parent=59 // pred_fallthru
          _
      $region60: #{tpu_custom_call.1} parent=5 // pred_fallthru
        _
    $region6: #{tpu_custom_call.1} parent=1 // loop_footer
      %s27 = sadd.s32 1, %s23
    $region7: #{tpu_custom_call.1} parent=1 // loop_footer_branch
      %22 = sbr.rel target = $region3
    $region8: #{tpu_custom_call.1} parent=1 // loop_exit
      _
    %605 = vsyncpa [#allocation3], 1
    %s606 = scalar_lea.sflag [#allocation3], 1
    %607 = vsyncpa %s606, 1
    %608 = vsyncpa [#allocation4], 1
    %s609 = scalar_lea.sflag [#allocation4], 1
    %610 = vsyncpa %s609, 1
    %611 = vsyncpa [#allocation7], 1
    %s612 = scalar_lea.sflag [#allocation7], 1
    %613 = vsyncpa %s612, 1

</llo_original>
